<compile_context>
chip_gen: v7x
topology: tpu7x:2x2x1
jax: 0.10.0
libtpu: 0.0.40
codegen_flags: <defaults>
</compile_context>

<pallas_src>
import jax
import jax.numpy as jnp
from jax.experimental import pallas as pl
from jax.experimental.pallas import tpu as pltpu

EPS = 1e-5
OUT_PAD = 128  # lane-dense padded width of the 2-class head


def vad_kernel(x_ref,
               w1_ref, t1_ref,
               w2_ref, t2_ref,
               w3_ref, t3_ref,
               wo_ref, bo_ref,
               out_ref):
    cdt = w1_ref.dtype  # matmul input dtype (bf16 or f32); accumulation is f32
    # conv1(k=16) folded with bn1 -> relu(x @ w1' + t1')
    h = jnp.dot(x_ref[...], w1_ref[...], preferred_element_type=jnp.float32) + t1_ref[...]
    h = jnp.maximum(h, 0.0).astype(cdt)
    # conv2(1x1) folded with bn2
    h = jnp.dot(h, w2_ref[...], preferred_element_type=jnp.float32) + t2_ref[...]
    h = jnp.maximum(h, 0.0).astype(cdt)
    # conv3(1x1) folded with bn3
    h = jnp.dot(h, w3_ref[...], preferred_element_type=jnp.float32) + t3_ref[...]
    h = jnp.maximum(h, 0.0).astype(cdt)
    # TODO(synk): dropout1(p=0.1) is identity in eval mode; training-mode RNG mask not emitted.
    # out Linear(64, 2), zero-padded to 128 lanes
    out_ref[...] = jnp.dot(h, wo_ref[...], preferred_element_type=jnp.float32) + bo_ref[...]


def _fold_conv_bn(w_io, conv_b, gamma, beta, mean, var):
    """Fold eval-mode BatchNorm into a (in, out) weight and a (1, out) shift."""
    scale = gamma / jnp.sqrt(var + EPS)              # (out,)
    shift = beta - mean * scale                      # (out,)
    w_folded = w_io * scale[None, :]                 # column scale
    t_folded = (conv_b * scale + shift).reshape(1, -1)
    return w_folded, t_folded


def vad_forward(x, p, *, tb=512, compute_dtype=jnp.bfloat16):
    """x: (B, 5, 16) float32 (NCL, like PyTorch). Returns (B, 2) f32 logits."""
    B = x.shape[0]
    x_flat = x.reshape(B, -1).astype(jnp.float32)            # (B, 80)
    in_dim = x_flat.shape[1]

    # Batch tiling: keep tb a multiple of 8, don't over-pad tiny batches,
    # pad B up to a multiple of tb so any batch size works with a big tile.
    tb = max(8, (int(tb) // 8) * 8)
    tb = min(tb, max(8, ((B + 7) // 8) * 8))
    grid_b = pl.cdiv(B, tb)
    b_pad = grid_b * tb
    if b_pad != B:
        x_flat = jnp.pad(x_flat, ((0, b_pad - B), (0, 0)))

    # Fold BN(eval) + conv bias into weights / shifts (done once, outside kernel).
    w1, t1 = _fold_conv_bn(p["conv1_w"].reshape(64, 80).T, p["conv1_b"],
                           p["bn1_g"], p["bn1_b"], p["bn1_m"], p["bn1_v"])   # (80,64),(1,64)
    w2, t2 = _fold_conv_bn(p["conv2_w"].reshape(256, 64).T, p["conv2_b"],
                           p["bn2_g"], p["bn2_b"], p["bn2_m"], p["bn2_v"])   # (64,256),(1,256)
    w3, t3 = _fold_conv_bn(p["conv3_w"].reshape(64, 256).T, p["conv3_b"],
                           p["bn3_g"], p["bn3_b"], p["bn3_m"], p["bn3_v"])   # (256,64),(1,64)

    # Lane-dense head: zero-pad (64, 2) -> (64, 128) and (2,) -> (1, 128).
    wo = jnp.zeros((64, OUT_PAD), jnp.float32).at[:, :2].set(p["out_w"].T)
    bo = jnp.zeros((1, OUT_PAD), jnp.float32).at[:, :2].set(p["out_b"])

    # Matmul inputs in compute_dtype (bf16 on v6e/v7x); shifts stay f32.
    x_flat = x_flat.astype(compute_dtype)
    w1 = w1.astype(compute_dtype)
    w2 = w2.astype(compute_dtype)
    w3 = w3.astype(compute_dtype)
    wo = wo.astype(compute_dtype)

    def resident(a):
        # Constant block index -> stays VMEM-resident across grid steps.
        return pl.BlockSpec(a.shape, lambda i: (0, 0))

    flops = 2 * b_pad * (in_dim * 64 + 64 * 256 + 256 * 64 + 64 * OUT_PAD)
    weight_bytes = sum(int(a.size) * a.dtype.itemsize
                       for a in (w1, t1, w2, t2, w3, t3, wo, bo))
    bytes_accessed = (b_pad * (in_dim * x_flat.dtype.itemsize + OUT_PAD * 4)
                      + weight_bytes)

    out_padded = pl.pallas_call(
        vad_kernel,
        out_shape=jax.ShapeDtypeStruct((b_pad, OUT_PAD), jnp.float32),
        grid=(grid_b,),
        in_specs=[
            pl.BlockSpec((tb, in_dim), lambda i: (i, 0)),
            resident(w1), resident(t1),
            resident(w2), resident(t2),
            resident(w3), resident(t3),
            resident(wo), resident(bo),
        ],
        out_specs=pl.BlockSpec((tb, OUT_PAD), lambda i: (i, 0)),
        compiler_params=pltpu.CompilerParams(dimension_semantics=("parallel",)),
        cost_estimate=pl.CostEstimate(flops=int(flops), transcendentals=0,
                                      bytes_accessed=int(bytes_accessed)),
    )(x_flat, w1, t1, w2, t2, w3, t3, wo, bo)

    return out_padded[:B, :2]


def ref_forward(x, p):
    """Plain-JAX reference mirroring the PyTorch eval forward."""
    def bn(y, g, b, m, v):
        return (y - m[None, :, None]) / jnp.sqrt(v[None, :, None] + EPS) * g[None, :, None] + b[None, :, None]

    y = jnp.einsum("bcl,ocl->bo", x, p["conv1_w"])[:, :, None] + p["conv1_b"][None, :, None]
    y = jnp.maximum(bn(y, p["bn1_g"], p["bn1_b"], p["bn1_m"], p["bn1_v"]), 0.0)
    y = jnp.einsum("bcl,oc->bol", y, p["conv2_w"].reshape(256, 64)) + p["conv2_b"][None, :, None]
    y = jnp.maximum(bn(y, p["bn2_g"], p["bn2_b"], p["bn2_m"], p["bn2_v"]), 0.0)
    y = jnp.einsum("bcl,oc->bol", y, p["conv3_w"].reshape(64, 256)) + p["conv3_b"][None, :, None]
    y = jnp.maximum(bn(y, p["bn3_g"], p["bn3_b"], p["bn3_m"], p["bn3_v"]), 0.0)
    y = y.reshape(y.shape[0], -1)                            # (B, 64)
    return y @ p["out_w"].T + p["out_b"][None, :]


def init_params(key):
    ks = jax.random.split(key, 16)
    n = lambda k, shape, s=0.1: (jax.random.normal(k, shape, jnp.float32) * s)
    return {
        "conv1_w": n(ks[0], (64, 5, 16)),
        "conv1_b": n(ks[1], (64,)),
        "bn1_g": 1.0 + n(ks[2], (64,)),
        "bn1_b": n(ks[3], (64,)),
        "bn1_m": n(ks[4], (64,)),
        "bn1_v": 0.5 + jnp.abs(n(ks[5], (64,))),
        "conv2_w": n(ks[6], (256, 64, 1)),
        "conv2_b": n(ks[7], (256,)),
        "bn2_g": 1.0 + n(ks[8], (256,)),
        "bn2_b": n(ks[9], (256,)),
        "bn2_m": n(ks[10], (256,)),
        "bn2_v": 0.5 + jnp.abs(n(ks[11], (256,))),
        "conv3_w": n(ks[12], (64, 256, 1)),
        "conv3_b": n(ks[13], (64,)),
        "bn3_g": 1.0 + n(ks[14], (64,)),
        "bn3_b": n(ks[15], (64,)),
        "bn3_m": jnp.zeros((64,), jnp.float32),
        "bn3_v": jnp.ones((64,), jnp.float32),
        "out_w": n(jax.random.fold_in(key, 100), (2, 64)),
        "out_b": n(jax.random.fold_in(key, 101), (2,)),
    }


if __name__ == "__main__":
    key = jax.random.PRNGKey(0)
    params = init_params(key)
    # Input length must be 16 (kernel_size=16 + Linear(64, 2) head => conv output length 1).
    x = jax.random.normal(jax.random.fold_in(key, 7), (8, 5, 16), jnp.float32)
    ref = ref_forward(x, params)

    # f32 path: tight validation against the plain-JAX reference.
    logits_f32 = jax.block_until_ready(
        vad_forward(x, params, compute_dtype=jnp.float32))
    assert logits_f32.shape == (8, 2)
    assert jnp.allclose(logits_f32, ref, atol=1e-4, rtol=1e-4), (
        f"f32 max abs err {jnp.max(jnp.abs(logits_f32 - ref))}")

    # bf16 path (default, fast MXU path on v6e/v7x): looser tolerance.
    logits_bf16 = jax.block_until_ready(vad_forward(x, params))
    assert logits_bf16.shape == (8, 2)
    assert jnp.allclose(logits_bf16, ref, atol=5e-2, rtol=5e-2), (
        f"bf16 max abs err {jnp.max(jnp.abs(logits_bf16 - ref))}")

    # Ragged batch (B not a multiple of the tile) exercises the cdiv/pad path.
    x2 = jax.random.normal(jax.random.fold_in(key, 11), (13, 5, 16), jnp.float32)
    out2 = jax.block_until_ready(
        vad_forward(x2, params, tb=8, compute_dtype=jnp.float32))
    assert out2.shape == (13, 2)
    assert jnp.allclose(out2, ref_forward(x2, params), atol=1e-4, rtol=1e-4)

    print("KERNEL_OK")
</pallas_src>

<mosaic_0001>
module attributes {stable_mosaic.version = 11 : i64} {
  func.func @vad_kernel(%arg0: i32, %arg1: memref<8x80xf32, #tpu.memory_space<vmem>>, %arg2: memref<80x64xf32, #tpu.memory_space<vmem>>, %arg3: memref<1x64xf32, #tpu.memory_space<vmem>>, %arg4: memref<64x256xf32, #tpu.memory_space<vmem>>, %arg5: memref<1x256xf32, #tpu.memory_space<vmem>>, %arg6: memref<256x64xf32, #tpu.memory_space<vmem>>, %arg7: memref<1x64xf32, #tpu.memory_space<vmem>>, %arg8: memref<64x128xf32, #tpu.memory_space<vmem>>, %arg9: memref<1x128xf32, #tpu.memory_space<vmem>>, %arg10: memref<8x128xf32, #tpu.memory_space<vmem>>) attributes {dimension_semantics = [#tpu.dimension_semantics<parallel>], iteration_bounds = array<i64: 1>, scalar_prefetch = 0 : i64, scratch_operands = 0 : i64, tpu.core_type = #tpu.core_type<tc>, window_params = [{transform_indices = @transform_0, window_bounds = array<i64: 8, 80>}, {pipeline_mode = #tpu.pipeline_mode<synchronous>, transform_indices = @transform_1, window_bounds = array<i64: 80, 64>}, {pipeline_mode = #tpu.pipeline_mode<synchronous>, transform_indices = @transform_2, window_bounds = array<i64: 1, 64>}, {pipeline_mode = #tpu.pipeline_mode<synchronous>, transform_indices = @transform_3, window_bounds = array<i64: 64, 256>}, {pipeline_mode = #tpu.pipeline_mode<synchronous>, transform_indices = @transform_4, window_bounds = array<i64: 1, 256>}, {pipeline_mode = #tpu.pipeline_mode<synchronous>, transform_indices = @transform_5, window_bounds = array<i64: 256, 64>}, {pipeline_mode = #tpu.pipeline_mode<synchronous>, transform_indices = @transform_6, window_bounds = array<i64: 1, 64>}, {pipeline_mode = #tpu.pipeline_mode<synchronous>, transform_indices = @transform_7, window_bounds = array<i64: 64, 128>}, {pipeline_mode = #tpu.pipeline_mode<synchronous>, transform_indices = @transform_8, window_bounds = array<i64: 1, 128>}, {transform_indices = @transform_9, window_bounds = array<i64: 8, 128>}]} {
    %c0 = arith.constant 0 : index
    %c0_0 = arith.constant 0 : index
    %0 = vector.load %arg1[%c0, %c0_0] : memref<8x80xf32, #tpu.memory_space<vmem>>, vector<8x80xf32>
    %c0_1 = arith.constant 0 : index
    %c0_2 = arith.constant 0 : index
    %1 = vector.load %arg2[%c0_1, %c0_2] : memref<80x64xf32, #tpu.memory_space<vmem>>, vector<80x64xf32>
    %cst = arith.constant dense<0.000000e+00> : vector<8x64xf32>
    %2 = tpu.matmul %0, %1, %cst {dimension_numbers = #tpu.dot_dimension_numbers<[1], [0], [0], [1], [0, 0, 1, 1], [], []>} : vector<8x80xf32>, vector<80x64xf32>, vector<8x64xf32> -> vector<8x64xf32>
    %c0_3 = arith.constant 0 : index
    %c0_4 = arith.constant 0 : index
    %3 = vector.load %arg3[%c0_3, %c0_4] : memref<1x64xf32, #tpu.memory_space<vmem>>, vector<1x64xf32>
    %4 = vector.broadcast %3 : vector<1x64xf32> to vector<8x64xf32>
    %5 = arith.addf %2, %4 : vector<8x64xf32>
    %cst_5 = arith.constant 0.000000e+00 : f32
    %6 = vector.broadcast %cst_5 : f32 to vector<8x64xf32>
    %7 = arith.maximumf %5, %6 : vector<8x64xf32>
    %c0_6 = arith.constant 0 : index
    %c0_7 = arith.constant 0 : index
    %8 = vector.load %arg4[%c0_6, %c0_7] : memref<64x256xf32, #tpu.memory_space<vmem>>, vector<64x256xf32>
    %cst_8 = arith.constant dense<0.000000e+00> : vector<8x256xf32>
    %9 = tpu.matmul %7, %8, %cst_8 {dimension_numbers = #tpu.dot_dimension_numbers<[1], [0], [0], [1], [0, 0, 1, 1], [], []>} : vector<8x64xf32>, vector<64x256xf32>, vector<8x256xf32> -> vector<8x256xf32>
    %c0_9 = arith.constant 0 : index
    %c0_10 = arith.constant 0 : index
    %10 = vector.load %arg5[%c0_9, %c0_10] : memref<1x256xf32, #tpu.memory_space<vmem>>, vector<1x256xf32>
    %11 = vector.broadcast %10 : vector<1x256xf32> to vector<8x256xf32>
    %12 = arith.addf %9, %11 : vector<8x256xf32>
    %cst_11 = arith.constant 0.000000e+00 : f32
    %13 = vector.broadcast %cst_11 : f32 to vector<8x256xf32>
    %14 = arith.maximumf %12, %13 : vector<8x256xf32>
    %c0_12 = arith.constant 0 : index
    %c0_13 = arith.constant 0 : index
    %15 = vector.load %arg6[%c0_12, %c0_13] : memref<256x64xf32, #tpu.memory_space<vmem>>, vector<256x64xf32>
    %cst_14 = arith.constant dense<0.000000e+00> : vector<8x64xf32>
    %16 = tpu.matmul %14, %15, %cst_14 {dimension_numbers = #tpu.dot_dimension_numbers<[1], [0], [0], [1], [0, 0, 1, 1], [], []>} : vector<8x256xf32>, vector<256x64xf32>, vector<8x64xf32> -> vector<8x64xf32>
    %c0_15 = arith.constant 0 : index
    %c0_16 = arith.constant 0 : index
    %17 = vector.load %arg7[%c0_15, %c0_16] : memref<1x64xf32, #tpu.memory_space<vmem>>, vector<1x64xf32>
    %18 = vector.broadcast %17 : vector<1x64xf32> to vector<8x64xf32>
    %19 = arith.addf %16, %18 : vector<8x64xf32>
    %cst_17 = arith.constant 0.000000e+00 : f32
    %20 = vector.broadcast %cst_17 : f32 to vector<8x64xf32>
    %21 = arith.maximumf %19, %20 : vector<8x64xf32>
    %c0_18 = arith.constant 0 : index
    %c0_19 = arith.constant 0 : index
    %22 = vector.load %arg8[%c0_18, %c0_19] : memref<64x128xf32, #tpu.memory_space<vmem>>, vector<64x128xf32>
    %cst_20 = arith.constant dense<0.000000e+00> : vector<8x128xf32>
    %23 = tpu.matmul %21, %22, %cst_20 {dimension_numbers = #tpu.dot_dimension_numbers<[1], [0], [0], [1], [0, 0, 1, 1], [], []>} : vector<8x64xf32>, vector<64x128xf32>, vector<8x128xf32> -> vector<8x128xf32>
    %c0_21 = arith.constant 0 : index
    %c0_22 = arith.constant 0 : index
    %24 = vector.load %arg9[%c0_21, %c0_22] : memref<1x128xf32, #tpu.memory_space<vmem>>, vector<1x128xf32>
    %25 = vector.broadcast %24 : vector<1x128xf32> to vector<8x128xf32>
    %26 = arith.addf %23, %25 : vector<8x128xf32>
    %c0_23 = arith.constant 0 : index
    %c0_24 = arith.constant 0 : index
    %27 = vector.load %arg10[%c0_23, %c0_24] : memref<8x128xf32, #tpu.memory_space<vmem>>, vector<8x128xf32>
    tpu.vector_store %arg10[%c0_23, %c0_24], %26 {strides = array<i32>} : memref<8x128xf32, #tpu.memory_space<vmem>>, vector<8x128xf32>,
    return
  }
  func.func @transform_0(%arg0: i32) -> (i32, i32) {
    %c0_i32 = arith.constant 0 : i32
    %c0_i32_0 = arith.constant 0 : i32
    return %arg0, %c0_i32 : i32, i32
  }
  func.func @transform_1(%arg0: i32) -> (i32, i32) {
    %c0_i32 = arith.constant 0 : i32
    %c0_i32_0 = arith.constant 0 : i32
    %c0_i32_1 = arith.constant 0 : i32
    return %c0_i32, %c0_i32_0 : i32, i32
  }
  func.func @transform_2(%arg0: i32) -> (i32, i32) {
    %c0_i32 = arith.constant 0 : i32
    %c0_i32_0 = arith.constant 0 : i32
    %c0_i32_1 = arith.constant 0 : i32
    return %c0_i32, %c0_i32_0 : i32, i32
  }
  func.func @transform_3(%arg0: i32) -> (i32, i32) {
    %c0_i32 = arith.constant 0 : i32
    %c0_i32_0 = arith.constant 0 : i32
    %c0_i32_1 = arith.constant 0 : i32
    return %c0_i32, %c0_i32_0 : i32, i32
  }
  func.func @transform_4(%arg0: i32) -> (i32, i32) {
    %c0_i32 = arith.constant 0 : i32
    %c0_i32_0 = arith.constant 0 : i32
    %c0_i32_1 = arith.constant 0 : i32
    return %c0_i32, %c0_i32_0 : i32, i32
  }
  func.func @transform_5(%arg0: i32) -> (i32, i32) {
    %c0_i32 = arith.constant 0 : i32
    %c0_i32_0 = arith.constant 0 : i32
    %c0_i32_1 = arith.constant 0 : i32
    return %c0_i32, %c0_i32_0 : i32, i32
  }
  func.func @transform_6(%arg0: i32) -> (i32, i32) {
    %c0_i32 = arith.constant 0 : i32
    %c0_i32_0 = arith.constant 0 : i32
    %c0_i32_1 = arith.constant 0 : i32
    return %c0_i32, %c0_i32_0 : i32, i32
  }
  func.func @transform_7(%arg0: i32) -> (i32, i32) {
    %c0_i32 = arith.constant 0 : i32
    %c0_i32_0 = arith.constant 0 : i32
    %c0_i32_1 = arith.constant 0 : i32
    return %c0_i32, %c0_i32_0 : i32, i32
  }
  func.func @transform_8(%arg0: i32) -> (i32, i32) {
    %c0_i32 = arith.constant 0 : i32
    %c0_i32_0 = arith.constant 0 : i32
    %c0_i32_1 = arith.constant 0 : i32
    return %c0_i32, %c0_i32_0 : i32, i32
  }
  func.func @transform_9(%arg0: i32) -> (i32, i32) {
    %c0_i32 = arith.constant 0 : i32
    %c0_i32_0 = arith.constant 0 : i32
    return %arg0, %c0_i32 : i32, i32
  }
}

</mosaic_0001>

<llo_original>
// kernel: tpu_custom_call.1
$region0: #{tpu_custom_call.1}
  #allocation0 [shape = 'u32[]', space=smem, size = 0x4, offset = 0x4, fixed_abs, tag = 'smem constant byte address 0x4 - core index']
  #allocation1 [shape = 'u32[144,128]{1,0:T(1,128)}', space=vmem, size = 0x12000, scoped, tag = 'internal scratch']
  %s0 = inlined_call_operand.vmem [shape: f32[8,80], index: 0, kind: input, shape index: {}]
  %s1 = inlined_call_operand.vmem [shape: f32[80,64], index: 1, kind: input, shape index: {}]
  %s2 = inlined_call_operand.vmem [shape: f32[1,64], index: 2, kind: input, shape index: {}]
  %s3 = inlined_call_operand.vmem [shape: f32[64,256], index: 3, kind: input, shape index: {}]
  %s4 = inlined_call_operand.vmem [shape: f32[1,256], index: 4, kind: input, shape index: {}]
  %s5 = inlined_call_operand.vmem [shape: f32[256,64], index: 5, kind: input, shape index: {}]
  %s6 = inlined_call_operand.vmem [shape: f32[1,64], index: 6, kind: input, shape index: {}]
  %s7 = inlined_call_operand.vmem [shape: f32[64,128], index: 7, kind: input, shape index: {}]
  %s8 = inlined_call_operand.vmem [shape: f32[1,128], index: 8, kind: input, shape index: {}]
  %s9 = inlined_call_operand.hbm [shape: f32[8,128], index: 9, kind: output, shape index: {}]
  %s10 = sld [smem:[#allocation0]]
  $region46: #{tpu_custom_call.1} parent=0
    _
  %s12 = ssub.s32 1, %s10
  %s13 = scalar_select 0, %s12, %s10
  $region1: #{tpu_custom_call.1} parent=0
    #allocation2 [shape = 'u8[4096]{0}', space=vmem, size = 0x1000, scoped, tag = 'output window, operand 0, single buffered']
    #allocation3 [shape = 's32[1]{0}', space=sflag, size = 0x4, scoped, tag = 'scoped memory for tpu_custom_call.1']
    %14 = vsyncpa [#allocation3], 0
    // Predicated region
    $region2: #{tpu_custom_call.1} parent=1 // pred_check
      _
    $region3: #{tpu_custom_call.1} parent=1 // pred_check_branch
      %16 = sbr.rel (0) target = $region5
    $region4: #{tpu_custom_call.1} parent=1 // pred_region
      _
    $region5: #{tpu_custom_call.1} parent=1 // pred_fallthru
      _
    // Predicated region
    $region6: #{tpu_custom_call.1} parent=1 // pred_check
      _
    $region7: #{tpu_custom_call.1} parent=1 // pred_check_branch
      %18 = sbr.rel (0) target = $region9
    $region8: #{tpu_custom_call.1} parent=1 // pred_region
      _
    $region9: #{tpu_custom_call.1} parent=1 // pred_fallthru
      _
    // Predicated region
    $region10: #{tpu_custom_call.1} parent=1 // pred_check
      _
    $region11: #{tpu_custom_call.1} parent=1 // pred_check_branch
      %20 = sbr.rel (0) target = $region13
    $region12: #{tpu_custom_call.1} parent=1 // pred_region
      _
    $region13: #{tpu_custom_call.1} parent=1 // pred_fallthru
      _
    // Predicated region
    $region14: #{tpu_custom_call.1} parent=1 // pred_check
      _
    $region15: #{tpu_custom_call.1} parent=1 // pred_check_branch
      %22 = sbr.rel (0) target = $region17
    $region16: #{tpu_custom_call.1} parent=1 // pred_region
      _
    $region17: #{tpu_custom_call.1} parent=1 // pred_fallthru
      _
    // Predicated region
    $region18: #{tpu_custom_call.1} parent=1 // pred_check
      _
    $region19: #{tpu_custom_call.1} parent=1 // pred_check_branch
      %24 = sbr.rel (0) target = $region21
    $region20: #{tpu_custom_call.1} parent=1 // pred_region
      _
    $region21: #{tpu_custom_call.1} parent=1 // pred_fallthru
      _
    // Predicated region
    $region22: #{tpu_custom_call.1} parent=1 // pred_check
      _
    $region23: #{tpu_custom_call.1} parent=1 // pred_check_branch
      %26 = sbr.rel (0) target = $region25
    $region24: #{tpu_custom_call.1} parent=1 // pred_region
      _
    $region25: #{tpu_custom_call.1} parent=1 // pred_fallthru
      _
    // Predicated region
    $region26: #{tpu_custom_call.1} parent=1 // pred_check
      _
    $region27: #{tpu_custom_call.1} parent=1 // pred_check_branch
      %28 = sbr.rel (0) target = $region29
    $region28: #{tpu_custom_call.1} parent=1 // pred_region
      _
    $region29: #{tpu_custom_call.1} parent=1 // pred_fallthru
      _
    // Predicated region
    $region30: #{tpu_custom_call.1} parent=1 // pred_check
      _
    $region31: #{tpu_custom_call.1} parent=1 // pred_check_branch
      %30 = sbr.rel (0) target = $region33
    $region32: #{tpu_custom_call.1} parent=1 // pred_region
      _
    $region33: #{tpu_custom_call.1} parent=1 // pred_fallthru
      _
    // Predicated region
    $region34: #{tpu_custom_call.1} parent=1 // pred_check
      _
    $region35: #{tpu_custom_call.1} parent=1 // pred_check_branch
      %32 = sbr.rel (0) target = $region37
    $region36: #{tpu_custom_call.1} parent=1 // pred_region
      _
    $region37: #{tpu_custom_call.1} parent=1 // pred_fallthru
      _
    %v33 = vld [vmem:[%s0] sm:$0xff]
    %v34 = vld [vmem:[%s1] sm:$0xff]
    %v35 = vld [vmem:[%s1 + $0x8] sm:$0xff]
    %v36 = vld [vmem:[%s1 + $0x10] sm:$0xff]
    %v37 = vld [vmem:[%s1 + $0x18] sm:$0xff]
    %v38 = vld [vmem:[%s1 + $0x20] sm:$0xff]
    %v39 = vld [vmem:[%s1 + $0x28] sm:$0xff]
    %v40 = vld [vmem:[%s1 + $0x30] sm:$0xff]
    %v41 = vld [vmem:[%s1 + $0x38] sm:$0xff]
    %v42 = vld [vmem:[%s1 + $0x40] sm:$0xff]
    %v43 = vld [vmem:[%s1 + $0x48] sm:$0xff]
    %v44 = vld [vmem:[%s2] sm:$0x1]
    %v46 = vlaneseq
    %v47 = vshrl.u32 %v46, 7
    %v48 = vsub.s32 0, %v47
    %v49 = vrot.slane %v44, %v48
    %vm51 = vcmask 654336
    %v53 = vsel %vm51, %v33, 0
    %55 = vmatprep.subr.mxu0 0.0
    %56 = vmatpush1.msra.mxu0 %v34
    %57 = vmatprep.subr.mxu0 0.0
    %58 = vmatpush1.msra.mxu0 %v35
    %59 = vmatprep.subr.mxu0 0.0
    %60 = vmatpush1.msra.mxu0 %v36
    %61 = vmatprep.subr.mxu0 0.0
    %62 = vmatpush1.msra.mxu0 %v37
    %63 = vmatprep.subr.mxu0 0.0
    %64 = vmatpush1.msra.mxu0 %v38
    %65 = vmatprep.subr.mxu0 0.0
    %66 = vmatpush1.msra.mxu0 %v39
    %67 = vmatprep.subr.mxu0 0.0
    %68 = vmatpush1.msra.mxu0 %v40
    %69 = vmatprep.subr.mxu0 0.0
    %70 = vmatpush1.msra.mxu0 %v41
    %71 = vmatprep.subr.mxu0 0.0
    %72 = vmatpush1.msra.mxu0 %v42
    %73 = vmatprep.subr.mxu0 0.0
    %74 = vmatpush1.msra.mxu0 %v43
    %75 = vmatprep.subr.mxu0 0.0
    %76 = vmatpush1.msra.mxu0 0.0
    %77 = vmatprep.subr.mxu0 0.0
    %78 = vmatpush1.msra.mxu0 0.0
    %79 = vmatprep.subr.mxu0 0.0
    %80 = vmatpush1.msra.mxu0 0.0
    %81 = vmatprep.subr.mxu0 0.0
    %82 = vmatpush1.msra.mxu0 0.0
    %83 = vmatprep.subr.mxu0 0.0
    %84 = vmatpush1.msra.mxu0 0.0
    %85 = vmatprep.subr.mxu0 0.0
    %86 = vmatpush1.msra.mxu0 0.0
    %87 = vmatprep.subr.mxu0 0.0
    %88 = vmatpush1.msra.mxu0 0.0
    %89 = vmatprep.subr.mxu0 0.0
    %90 = vmatpush1.msra.mxu0 0.0
    %91 = vmatprep.subr.mxu0 0.0
    %92 = vmatpush1.msra.mxu0 0.0
    %93 = vmatprep.subr.mxu0 0.0
    %94 = vmatpush1.msra.mxu0 0.0
    %95 = vmatprep.subr.mxu0 0.0
    %96 = vmatpush1.msra.mxu0 0.0
    %97 = vmatprep.subr.mxu0 0.0
    %98 = vmatpush1.msra.mxu0 0.0
    %99 = vmatprep.subr.mxu0 0.0
    %100 = vmatpush1.msra.mxu0 0.0
    %101 = vmatprep.subr.mxu0 0.0
    %102 = vmatpush1.msra.mxu0 0.0
    %103 = vmatprep.subr.mxu0 0.0
    %104 = vmatpush1.msra.mxu0 0.0
    %105 = vmatprep.subr.mxu0 0.0
    %106 = vmatpush1.msra.mxu0 0.0
    %107 = vmatprep.subr.mxu0 0.0
    %108 = vmatpush1.msra.mxu0 0.0
    %109 = vmatprep.subr.mxu0 0.0
    %110 = vmatpush1.msra.mxu0 0.0
    %111 = vmatprep.subr.mxu0 0.0
    %112 = vmatpush1.msra.mxu0 0.0
    %113 = vmatprep.subr.mxu0 0.0
    %114 = vmatpush1.msra.mxu0 0.0
    %115 = vmatprep.subr.mxu0 0.0
    %116 = vmatpush1.msra.mxu0 0.0
    %117 = vmatprep.subr.mxu0 0.0
    %118 = vmatpush1.msra.mxu0 0.0
    %119 = vmatprep.mubr.f32.mxu0 0.0
    %120 = vmatmul.mubr.f32.gmra.mrb[0].mxu0 %v53
    %v121 = vpop.f32.mrb[0].mxu0
    %v122 = vadd.f32 %v49, %v121
    %v123 = vpop.f32.mrb[0].mxu0
    %124 = vdwg.mxu0
    %v125 = vmax.f32 %v122, 0.0
    %v126 = vld [vmem:[%s3] sm:$0xff]
    %v127 = vld [vmem:[%s3 + $0x8] sm:$0xff]
    %v128 = vld [vmem:[%s3 + $0x10] sm:$0xff]
    %v129 = vld [vmem:[%s3 + $0x18] sm:$0xff]
    %v130 = vld [vmem:[%s3 + $0x20] sm:$0xff]
    %v131 = vld [vmem:[%s3 + $0x28] sm:$0xff]
    %v132 = vld [vmem:[%s3 + $0x30] sm:$0xff]
    %v133 = vld [vmem:[%s3 + $0x38] sm:$0xff]
    %v134 = vld [vmem:[%s3 + $0x40] sm:$0xff]
    %v135 = vld [vmem:[%s3 + $0x48] sm:$0xff]
    %v136 = vld [vmem:[%s3 + $0x50] sm:$0xff]
    %v137 = vld [vmem:[%s3 + $0x58] sm:$0xff]
    %v138 = vld [vmem:[%s3 + $0x60] sm:$0xff]
    %v139 = vld [vmem:[%s3 + $0x68] sm:$0xff]
    %v140 = vld [vmem:[%s3 + $0x70] sm:$0xff]
    %v141 = vld [vmem:[%s3 + $0x78] sm:$0xff]
    %v142 = vld [vmem:[%s4] sm:$0x3]
    %v144 = vlaneseq
    %v145 = vshrl.u32 %v144, 7
    %v146 = vsub.s32 0, %v145
    %v147 = vrot.slane %v142, %v146
    %v148 = vlaneseq
    %v149 = vshrl.u32 %v148, 7
    %v150 = vsub.s32 1, %v149
    %v151 = vrot.slane %v142, %v150
    %vm154 = vcmask 523264
    %v156 = vsel %vm154, %v125, 0
    %158 = vmatprep.subr.mxu0 %v127
    %159 = vmatpush1.msra.mxu0 %v126
    %160 = vmatprep.subr.mxu0 %v129
    %161 = vmatpush1.msra.mxu0 %v128
    %162 = vmatprep.subr.mxu0 %v131
    %163 = vmatpush1.msra.mxu0 %v130
    %164 = vmatprep.subr.mxu0 %v133
    %165 = vmatpush1.msra.mxu0 %v132
    %166 = vmatprep.subr.mxu0 %v135
    %167 = vmatpush1.msra.mxu0 %v134
    %168 = vmatprep.subr.mxu0 %v137
    %169 = vmatpush1.msra.mxu0 %v136
    %170 = vmatprep.subr.mxu0 %v139
    %171 = vmatpush1.msra.mxu0 %v138
    %172 = vmatprep.subr.mxu0 %v141
    %173 = vmatpush1.msra.mxu0 %v140
    %174 = vmatprep.subr.mxu0 0.0
    %175 = vmatpush1.msra.mxu0 0.0
    %176 = vmatprep.subr.mxu0 0.0
    %177 = vmatpush1.msra.mxu0 0.0
    %178 = vmatprep.subr.mxu0 0.0
    %179 = vmatpush1.msra.mxu0 0.0
    %180 = vmatprep.subr.mxu0 0.0
    %181 = vmatpush1.msra.mxu0 0.0
    %182 = vmatprep.subr.mxu0 0.0
    %183 = vmatpush1.msra.mxu0 0.0
    %184 = vmatprep.subr.mxu0 0.0
    %185 = vmatpush1.msra.mxu0 0.0
    %186 = vmatprep.subr.mxu0 0.0
    %187 = vmatpush1.msra.mxu0 0.0
    %188 = vmatprep.subr.mxu0 0.0
    %189 = vmatpush1.msra.mxu0 0.0
    %190 = vmatprep.subr.mxu0 0.0
    %191 = vmatpush1.msra.mxu0 0.0
    %192 = vmatprep.subr.mxu0 0.0
    %193 = vmatpush1.msra.mxu0 0.0
    %194 = vmatprep.subr.mxu0 0.0
    %195 = vmatpush1.msra.mxu0 0.0
    %196 = vmatprep.subr.mxu0 0.0
    %197 = vmatpush1.msra.mxu0 0.0
    %198 = vmatprep.subr.mxu0 0.0
    %199 = vmatpush1.msra.mxu0 0.0
    %200 = vmatprep.subr.mxu0 0.0
    %201 = vmatpush1.msra.mxu0 0.0
    %202 = vmatprep.subr.mxu0 0.0
    %203 = vmatpush1.msra.mxu0 0.0
    %204 = vmatprep.subr.mxu0 0.0
    %205 = vmatpush1.msra.mxu0 0.0
    %206 = vmatprep.subr.mxu0 0.0
    %207 = vmatpush1.msra.mxu0 0.0
    %208 = vmatprep.subr.mxu0 0.0
    %209 = vmatpush1.msra.mxu0 0.0
    %210 = vmatprep.subr.mxu0 0.0
    %211 = vmatpush1.msra.mxu0 0.0
    %212 = vmatprep.subr.mxu0 0.0
    %213 = vmatpush1.msra.mxu0 0.0
    %214 = vmatprep.subr.mxu0 0.0
    %215 = vmatpush1.msra.mxu0 0.0
    %216 = vmatprep.subr.mxu0 0.0
    %217 = vmatpush1.msra.mxu0 0.0
    %218 = vmatprep.subr.mxu0 0.0
    %219 = vmatpush1.msra.mxu0 0.0
    %220 = vmatprep.subr.mxu0 0.0
    %221 = vmatpush1.msra.mxu0 0.0
    %222 = vmatprep.mubr.f32.mxu0 0.0
    %223 = vmatmul.mubr.f32.gmra.mrb[0].mxu0 %v156
    %v224 = vpop.f32.mrb[0].mxu0
    %v225 = vadd.f32 %v147, %v224
    %v226 = vpop.f32.mrb[0].mxu0
    %v227 = vadd.f32 %v151, %v226
    %228 = vdwg.mxu0
    %v229 = vmax.f32 %v225, 0.0
    %v230 = vmax.f32 %v227, 0.0
    %v231 = vld [vmem:[%s5] sm:$0xff]
    %v232 = vld [vmem:[%s5 + $0x8] sm:$0xff]
    %v233 = vld [vmem:[%s5 + $0x10] sm:$0xff]
    %v234 = vld [vmem:[%s5 + $0x18] sm:$0xff]
    %v235 = vld [vmem:[%s5 + $0x20] sm:$0xff]
    %v236 = vld [vmem:[%s5 + $0x28] sm:$0xff]
    %v237 = vld [vmem:[%s5 + $0x30] sm:$0xff]
    %v238 = vld [vmem:[%s5 + $0x38] sm:$0xff]
    %v239 = vld [vmem:[%s5 + $0x40] sm:$0xff]
    %v240 = vld [vmem:[%s5 + $0x48] sm:$0xff]
    %v241 = vld [vmem:[%s5 + $0x50] sm:$0xff]
    %v242 = vld [vmem:[%s5 + $0x58] sm:$0xff]
    %v243 = vld [vmem:[%s5 + $0x60] sm:$0xff]
    %v244 = vld [vmem:[%s5 + $0x68] sm:$0xff]
    %v245 = vld [vmem:[%s5 + $0x70] sm:$0xff]
    %v246 = vld [vmem:[%s5 + $0x78] sm:$0xff]
    %v247 = vld [vmem:[%s5 + $0x80] sm:$0xff]
    %v248 = vld [vmem:[%s5 + $0x88] sm:$0xff]
    %v249 = vld [vmem:[%s5 + $0x90] sm:$0xff]
    %v250 = vld [vmem:[%s5 + $0x98] sm:$0xff]
    %v251 = vld [vmem:[%s5 + $0xa0] sm:$0xff]
    %v252 = vld [vmem:[%s5 + $0xa8] sm:$0xff]
    %v253 = vld [vmem:[%s5 + $0xb0] sm:$0xff]
    %v254 = vld [vmem:[%s5 + $0xb8] sm:$0xff]
    %v255 = vld [vmem:[%s5 + $0xc0] sm:$0xff]
    %v256 = vld [vmem:[%s5 + $0xc8] sm:$0xff]
    %v257 = vld [vmem:[%s5 + $0xd0] sm:$0xff]
    %v258 = vld [vmem:[%s5 + $0xd8] sm:$0xff]
    %v259 = vld [vmem:[%s5 + $0xe0] sm:$0xff]
    %v260 = vld [vmem:[%s5 + $0xe8] sm:$0xff]
    %v261 = vld [vmem:[%s5 + $0xf0] sm:$0xff]
    %v262 = vld [vmem:[%s5 + $0xf8] sm:$0xff]
    %v263 = vld [vmem:[%s6] sm:$0x1]
    %v265 = vlaneseq
    %v266 = vshrl.u32 %v265, 7
    %v267 = vsub.s32 0, %v266
    %v268 = vrot.slane %v263, %v267
    %270 = vmatprep.subr.mxu0 0.0
    %271 = vmatpush1.msra.mxu0 %v231
    %272 = vmatprep.subr.mxu0 0.0
    %273 = vmatpush1.msra.mxu0 %v232
    %274 = vmatprep.subr.mxu0 0.0
    %275 = vmatpush1.msra.mxu0 %v233
    %276 = vmatprep.subr.mxu0 0.0
    %277 = vmatpush1.msra.mxu0 %v234
    %278 = vmatprep.subr.mxu0 0.0
    %279 = vmatpush1.msra.mxu0 %v235
    %280 = vmatprep.subr.mxu0 0.0
    %281 = vmatpush1.msra.mxu0 %v236
    %282 = vmatprep.subr.mxu0 0.0
    %283 = vmatpush1.msra.mxu0 %v237
    %284 = vmatprep.subr.mxu0 0.0
    %285 = vmatpush1.msra.mxu0 %v238
    %286 = vmatprep.subr.mxu0 0.0
    %287 = vmatpush1.msra.mxu0 %v239
    %288 = vmatprep.subr.mxu0 0.0
    %289 = vmatpush1.msra.mxu0 %v240
    %290 = vmatprep.subr.mxu0 0.0
    %291 = vmatpush1.msra.mxu0 %v241
    %292 = vmatprep.subr.mxu0 0.0
    %293 = vmatpush1.msra.mxu0 %v242
    %294 = vmatprep.subr.mxu0 0.0
    %295 = vmatpush1.msra.mxu0 %v243
    %296 = vmatprep.subr.mxu0 0.0
    %297 = vmatpush1.msra.mxu0 %v244
    %298 = vmatprep.subr.mxu0 0.0
    %299 = vmatpush1.msra.mxu0 %v245
    %300 = vmatprep.subr.mxu0 0.0
    %301 = vmatpush1.msra.mxu0 %v246
    %302 = vmatprep.subr.mxu0 0.0
    %303 = vmatpush1.msra.mxu0 %v247
    %304 = vmatprep.subr.mxu0 0.0
    %305 = vmatpush1.msra.mxu0 %v248
    %306 = vmatprep.subr.mxu0 0.0
    %307 = vmatpush1.msra.mxu0 %v249
    %308 = vmatprep.subr.mxu0 0.0
    %309 = vmatpush1.msra.mxu0 %v250
    %310 = vmatprep.subr.mxu0 0.0
    %311 = vmatpush1.msra.mxu0 %v251
    %312 = vmatprep.subr.mxu0 0.0
    %313 = vmatpush1.msra.mxu0 %v252
    %314 = vmatprep.subr.mxu0 0.0
    %315 = vmatpush1.msra.mxu0 %v253
    %316 = vmatprep.subr.mxu0 0.0
    %317 = vmatpush1.msra.mxu0 %v254
    %318 = vmatprep.subr.mxu0 0.0
    %319 = vmatpush1.msra.mxu0 %v255
    %320 = vmatprep.subr.mxu0 0.0
    %321 = vmatpush1.msra.mxu0 %v256
    %322 = vmatprep.subr.mxu0 0.0
    %323 = vmatpush1.msra.mxu0 %v257
    %324 = vmatprep.subr.mxu0 0.0
    %325 = vmatpush1.msra.mxu0 %v258
    %326 = vmatprep.subr.mxu0 0.0
    %327 = vmatpush1.msra.mxu0 %v259
    %328 = vmatprep.subr.mxu0 0.0
    %329 = vmatpush1.msra.mxu0 %v260
    %330 = vmatprep.subr.mxu0 0.0
    %331 = vmatpush1.msra.mxu0 %v261
    %332 = vmatprep.subr.mxu0 0.0
    %333 = vmatpush1.msra.mxu0 %v262
    %334 = vmatprep.mubr.f32.mxu0 %v230
    %335 = vmatmul.mubr.f32.gmra.mrb[0].mxu0 %v229
    %v336 = vpop.f32.mrb[0].mxu0
    %v337 = vadd.f32 %v268, %v336
    %v338 = vpop.f32.mrb[0].mxu0
    %339 = vdwg.mxu0
    %v340 = vmax.f32 %v337, 0.0
    %v341 = vld [vmem:[%s7] sm:$0xff]
    %v342 = vld [vmem:[%s7 + $0x8] sm:$0xff]
    %v343 = vld [vmem:[%s7 + $0x10] sm:$0xff]
    %v344 = vld [vmem:[%s7 + $0x18] sm:$0xff]
    %v345 = vld [vmem:[%s7 + $0x20] sm:$0xff]
    %v346 = vld [vmem:[%s7 + $0x28] sm:$0xff]
    %v347 = vld [vmem:[%s7 + $0x30] sm:$0xff]
    %v348 = vld [vmem:[%s7 + $0x38] sm:$0xff]
    %v349 = vld [vmem:[%s8] sm:$0x1]
    %v351 = vlaneseq
    %v352 = vshrl.u32 %v351, 7
    %v353 = vsub.s32 0, %v352
    %v354 = vrot.slane %v349, %v353
    %v357 = vsel %vm154, %v340, 0
    %359 = vmatprep.subr.mxu0 0.0
    %360 = vmatpush1.msra.mxu0 %v341
    %361 = vmatprep.subr.mxu0 0.0
    %362 = vmatpush1.msra.mxu0 %v342
    %363 = vmatprep.subr.mxu0 0.0
    %364 = vmatpush1.msra.mxu0 %v343
    %365 = vmatprep.subr.mxu0 0.0
    %366 = vmatpush1.msra.mxu0 %v344
    %367 = vmatprep.subr.mxu0 0.0
    %368 = vmatpush1.msra.mxu0 %v345
    %369 = vmatprep.subr.mxu0 0.0
    %370 = vmatpush1.msra.mxu0 %v346
    %371 = vmatprep.subr.mxu0 0.0
    %372 = vmatpush1.msra.mxu0 %v347
    %373 = vmatprep.subr.mxu0 0.0
    %374 = vmatpush1.msra.mxu0 %v348
    %375 = vmatprep.subr.mxu0 0.0
    %376 = vmatpush1.msra.mxu0 0.0
    %377 = vmatprep.subr.mxu0 0.0
    %378 = vmatpush1.msra.mxu0 0.0
    %379 = vmatprep.subr.mxu0 0.0
    %380 = vmatpush1.msra.mxu0 0.0
    %381 = vmatprep.subr.mxu0 0.0
    %382 = vmatpush1.msra.mxu0 0.0
    %383 = vmatprep.subr.mxu0 0.0
    %384 = vmatpush1.msra.mxu0 0.0
    %385 = vmatprep.subr.mxu0 0.0
    %386 = vmatpush1.msra.mxu0 0.0
    %387 = vmatprep.subr.mxu0 0.0
    %388 = vmatpush1.msra.mxu0 0.0
    %389 = vmatprep.subr.mxu0 0.0
    %390 = vmatpush1.msra.mxu0 0.0
    %391 = vmatprep.subr.mxu0 0.0
    %392 = vmatpush1.msra.mxu0 0.0
    %393 = vmatprep.subr.mxu0 0.0
    %394 = vmatpush1.msra.mxu0 0.0
    %395 = vmatprep.subr.mxu0 0.0
    %396 = vmatpush1.msra.mxu0 0.0
    %397 = vmatprep.subr.mxu0 0.0
    %398 = vmatpush1.msra.mxu0 0.0
    %399 = vmatprep.subr.mxu0 0.0
    %400 = vmatpush1.msra.mxu0 0.0
    %401 = vmatprep.subr.mxu0 0.0
    %402 = vmatpush1.msra.mxu0 0.0
    %403 = vmatprep.subr.mxu0 0.0
    %404 = vmatpush1.msra.mxu0 0.0
    %405 = vmatprep.subr.mxu0 0.0
    %406 = vmatpush1.msra.mxu0 0.0
    %407 = vmatprep.subr.mxu0 0.0
    %408 = vmatpush1.msra.mxu0 0.0
    %409 = vmatprep.subr.mxu0 0.0
    %410 = vmatpush1.msra.mxu0 0.0
    %411 = vmatprep.subr.mxu0 0.0
    %412 = vmatpush1.msra.mxu0 0.0
    %413 = vmatprep.subr.mxu0 0.0
    %414 = vmatpush1.msra.mxu0 0.0
    %415 = vmatprep.subr.mxu0 0.0
    %416 = vmatpush1.msra.mxu0 0.0
    %417 = vmatprep.subr.mxu0 0.0
    %418 = vmatpush1.msra.mxu0 0.0
    %419 = vmatprep.subr.mxu0 0.0
    %420 = vmatpush1.msra.mxu0 0.0
    %421 = vmatprep.subr.mxu0 0.0
    %422 = vmatpush1.msra.mxu0 0.0
    %423 = vmatprep.mubr.f32.mxu0 0.0
    %424 = vmatmul.mubr.f32.gmra.mrb[0].mxu0 %v357
    %v425 = vpop.f32.mrb[0].mxu0
    %v426 = vadd.f32 %v354, %v425
    %v427 = vpop.f32.mrb[0].mxu0
    %428 = vdwg.mxu0
    %429 = vst [vmem:[#allocation2] sm:$0xff] %v426
    // Predicated region
    $region38: #{tpu_custom_call.1} parent=1 // pred_check
      _
    $region39: #{tpu_custom_call.1} parent=1 // pred_check_branch
      %431 = sbr.rel (0) target = $region41
    $region40: #{tpu_custom_call.1} parent=1 // pred_region
      %s433 = ssub.s32 128, 128
      %434 = vsyncadd [#allocation3], %s433
      %s436 = sshll.u32 [#allocation2], 4
      %s437 = int_to_ptr.vmem [resolvable:$true] %s436
      %439 = dma.vmem_to_hbm [thread:$0]  %s437, 128, %s9, [#allocation3]
    $region41: #{tpu_custom_call.1} parent=1 // pred_fallthru
      _
    // Predicated region
    $region42: #{tpu_custom_call.1} parent=1 // pred_check
      _
    $region43: #{tpu_custom_call.1} parent=1 // pred_check_branch
      %441 = sbr.rel (0) target = $region45
    $region44: #{tpu_custom_call.1} parent=1 // pred_region
      %442 = dma.done [#allocation3], 128
    $region45: #{tpu_custom_call.1} parent=1 // pred_fallthru
      _
    %443 = vsyncpa [#allocation3], 1

</llo_original>
